<compile_context>
chip_gen: v7x
topology: tpu7x:2x2x1
jax: 0.10.0
libtpu: 0.0.40
codegen_flags: <defaults>
</compile_context>

<pallas_src>
import functools

import jax
import jax.numpy as jnp
from jax.experimental import pallas as pl
from jax.experimental.pallas import tpu as pltpu


_LANE_CANDIDATES = (4096, 2048, 1024, 512, 256, 128)
_TARGET_BLOCK_BYTES = 2 * 1024 * 1024     # per block buffer (~8 MiB VMEM w/ dbl-buffered in+out)
_DEFAULT_MIN_ELEMENTS = 1 << 20           # below this, let XLA fuse the elementwise op
_VMEM_LIMIT_BYTES = 32 * 1024 * 1024      # safe on v5e/v6e/v7x


def _sublane_multiple(dtype):
    """Native sublane tile: 8 for 4-byte, 16 for 2-byte, 32 for 1-byte dtypes."""
    itemsize = jnp.dtype(dtype).itemsize
    return max(8, 32 // max(itemsize, 1))


def _elementwise_kernel(x_ref, o_ref, *, fn):
    o_ref[...] = fn(x_ref[...]).astype(o_ref.dtype)


def pallas_elementwise(fn, x, *, min_elements=_DEFAULT_MIN_ELEMENTS):
    """Apply elementwise `fn` to `x` via a Pallas TPU kernel (with fallbacks)."""
    n = x.size
    if n == 0 or n < min_elements:
        # Small activations: kernel launch overhead dominates; let XLA fuse.
        return fn(x)

    # Largest lane width that divides n -> free reshape, unmasked lane-dense stores.
    lanes = next((c for c in _LANE_CANDIDATES if n % c == 0), None)
    if lanes is None:
        # TODO(synk): element count not a multiple of 128; padding would need a
        # full HBM copy, so fall back to XLA's fused elementwise path instead.
        return fn(x)

    in_dtype = x.dtype
    out_dtype = jax.eval_shape(fn, jax.ShapeDtypeStruct(x.shape, in_dtype)).dtype

    rows = n // lanes
    in_itemsize = jnp.dtype(in_dtype).itemsize
    out_itemsize = jnp.dtype(out_dtype).itemsize
    itemsize = max(in_itemsize, out_itemsize)
    sub = max(_sublane_multiple(in_dtype), _sublane_multiple(out_dtype))

    # ~2 MiB per block buffer; rows a multiple of the native sublane tile so
    # the (sub, 128) layout constraint is satisfied without extra padding.
    tile_rows = max(sub, (_TARGET_BLOCK_BYTES // (lanes * itemsize)) // sub * sub)
    if tile_rows >= rows:
        tile_rows = rows  # single block == full array dims (always legal)

    grid = (pl.cdiv(rows, tile_rows),)  # partial last block handled (masked stores)
    x2d = x.reshape(rows, lanes)

    kernel = functools.partial(_elementwise_kernel, fn=fn)
    out2d = pl.pallas_call(
        kernel,
        out_shape=jax.ShapeDtypeStruct((rows, lanes), out_dtype),
        grid=grid,
        in_specs=[pl.BlockSpec((tile_rows, lanes), lambda i: (i, 0))],
        out_specs=pl.BlockSpec((tile_rows, lanes), lambda i: (i, 0)),
        compiler_params=pltpu.CompilerParams(
            dimension_semantics=("parallel",),
            vmem_limit_bytes=_VMEM_LIMIT_BYTES,
        ),
    )(x2d)
    return out2d.reshape(x.shape)


# ----------------------- canonical braindecode expressions ------------------
def _square_expr(v):
    return v * v


def _safe_log_expr(v, eps):
    return jnp.log(jnp.maximum(v, eps))


def square(x, *, min_elements=_DEFAULT_MIN_ELEMENTS):
    return pallas_elementwise(_square_expr, x, min_elements=min_elements)


def safe_log(x, eps=1e-6, *, min_elements=_DEFAULT_MIN_ELEMENTS):
    return pallas_elementwise(
        functools.partial(_safe_log_expr, eps=eps), x, min_elements=min_elements
    )


# ----------------------------- Expression module ----------------------------
class Expression:
    """JAX port of braindecode's Expression(nn.Module).

    forward(*x) simply calls expression_fn(*x), exactly like the PyTorch
    module.  Elementwise expressions such as `square` / `safe_log` defined
    above run their hot path inside a Pallas TPU kernel.
    """

    # TODO(synk): arbitrary non-elementwise expression_fns (e.g. reshape /
    # permute lambdas used in braindecode) are plain glue and are called
    # directly; only elementwise expressions use the Pallas hot path.

    def __init__(self, expression_fn):
        self.expression_fn = expression_fn

    def __call__(self, *x):
        return self.forward(*x)

    def forward(self, *x):
        return self.expression_fn(*x)

    def __repr__(self):
        if hasattr(self.expression_fn, "func") and hasattr(self.expression_fn, "kwargs"):
            expression_str = "{:s} {:s}".format(
                self.expression_fn.func.__name__, str(self.expression_fn.kwargs)
            )
        elif hasattr(self.expression_fn, "__name__"):
            expression_str = self.expression_fn.__name__
        else:
            expression_str = repr(self.expression_fn)
        return self.__class__.__name__ + "(expression=%s) " % expression_str


# ----------------------------- demo / check ---------------------------------
if __name__ == "__main__":
    key = jax.random.PRNGKey(0)
    k_small, k_med = jax.random.split(key)

    # --- small NCHW input (like a ShallowFBCSPNet conv activation) ----------
    x = jax.random.normal(k_small, (2, 4, 16, 16), dtype=jnp.float32)

    # Force the Pallas path even at this small size (min_elements=0) so the
    # kernel is exercised; default behaviour would bypass and let XLA fuse.
    expr_square = Expression(functools.partial(square, min_elements=0))
    y_sq = jax.block_until_ready(expr_square(x))
    ref_sq = x * x
    assert y_sq.shape == x.shape and y_sq.dtype == x.dtype
    assert jnp.allclose(y_sq, ref_sq, atol=1e-6, rtol=1e-6)

    expr_log = Expression(functools.partial(safe_log, min_elements=0))
    y_log = jax.block_until_ready(expr_log(y_sq))
    ref_log = jnp.log(jnp.maximum(ref_sq, 1e-6))
    assert jnp.allclose(y_log, ref_log, atol=1e-5, rtol=1e-5)

    # --- medium input: exercises multi-block grid + masked partial block ----
    xm = jax.random.normal(k_med, (2, 40, 1001, 8), dtype=jnp.float32)
    ym = jax.block_until_ready(Expression(functools.partial(square, min_elements=0))(xm))
    assert ym.shape == xm.shape
    assert jnp.allclose(ym, xm * xm, atol=1e-6, rtol=1e-6)

    # --- bf16 path: checks dtype-aware sublane tiling / output cast ---------
    xb16 = jax.random.normal(k_med, (4, 32, 256), dtype=jnp.bfloat16)
    yb16 = jax.block_until_ready(Expression(functools.partial(square, min_elements=0))(xb16))
    assert yb16.dtype == jnp.bfloat16 and yb16.shape == xb16.shape
    assert jnp.allclose(
        yb16.astype(jnp.float32), (xb16 * xb16).astype(jnp.float32), atol=1e-2, rtol=1e-2
    )

    # --- default small-input bypass (no Pallas, XLA fusion path) ------------
    yb = jax.block_until_ready(Expression(square)(x))
    assert jnp.allclose(yb, ref_sq, atol=1e-6, rtol=1e-6)

    # --- non-multiple-of-128 element count: XLA fallback path ---------------
    xo = jax.random.normal(k_small, (3, 5, 7), dtype=jnp.float32)
    yo = jax.block_until_ready(Expression(functools.partial(square, min_elements=0))(xo))
    assert jnp.allclose(yo, xo * xo, atol=1e-6, rtol=1e-6)

    print("KERNEL_OK")
</pallas_src>

<mosaic_0001>
module attributes {stable_mosaic.version = 11 : i64} {
  func.func @_elementwise_kernel(%arg0: i32, %arg1: memref<1x2048xf32, #tpu.memory_space<vmem>>, %arg2: memref<1x2048xf32, #tpu.memory_space<vmem>>) attributes {dimension_semantics = [#tpu.dimension_semantics<parallel>], iteration_bounds = array<i64: 1>, scalar_prefetch = 0 : i64, scratch_operands = 0 : i64, tpu.core_type = #tpu.core_type<tc>, window_params = [{transform_indices = @transform_0, window_bounds = array<i64: 1, 2048>}, {transform_indices = @transform_1, window_bounds = array<i64: 1, 2048>}]} {
    %c0 = arith.constant 0 : index
    %c0_0 = arith.constant 0 : index
    %0 = vector.load %arg1[%c0, %c0_0] : memref<1x2048xf32, #tpu.memory_space<vmem>>, vector<1x2048xf32>
    %1 = arith.mulf %0, %0 : vector<1x2048xf32>
    %c0_1 = arith.constant 0 : index
    %c0_2 = arith.constant 0 : index
    %2 = vector.load %arg2[%c0_1, %c0_2] : memref<1x2048xf32, #tpu.memory_space<vmem>>, vector<1x2048xf32>
    tpu.vector_store %arg2[%c0_1, %c0_2], %1 {strides = array<i32>} : memref<1x2048xf32, #tpu.memory_space<vmem>>, vector<1x2048xf32>,
    return
  }
  func.func @transform_0(%arg0: i32) -> (i32, i32) {
    %c0_i32 = arith.constant 0 : i32
    %c0_i32_0 = arith.constant 0 : i32
    return %arg0, %c0_i32 : i32, i32
  }
  func.func @transform_1(%arg0: i32) -> (i32, i32) {
    %c0_i32 = arith.constant 0 : i32
    %c0_i32_0 = arith.constant 0 : i32
    return %arg0, %c0_i32 : i32, i32
  }
}

</mosaic_0001>

<llo_original>
// kernel: tpu_custom_call.1
$region0: #{tpu_custom_call.1}
  #allocation0 [shape = 'u32[]', space=smem, size = 0x4, offset = 0x4, fixed_abs, tag = 'smem constant byte address 0x4 - core index']
  #allocation1 [shape = 'u32[144,128]{1,0:T(1,128)}', space=vmem, size = 0x12000, scoped, tag = 'internal scratch']
  %s0 = inlined_call_operand.hbm [shape: f32[1,2048], index: 0, kind: input, shape index: {}]
  %s1 = inlined_call_operand.hbm [shape: f32[1,2048], index: 1, kind: output, shape index: {}]
  %s2 = sld [smem:[#allocation0]]
  $region18: #{tpu_custom_call.1} parent=0
    _
  %s4 = ssub.s32 1, %s2
  %s5 = scalar_select 0, %s4, %s2
  $region1: #{tpu_custom_call.1} parent=0
    #allocation2 [shape = 'u8[8192]{0}', space=vmem, size = 0x2000, scoped, tag = 'input window, operand 0, single buffered']
    #allocation3 [shape = 's32[1]{0}', space=sflag, size = 0x4, scoped, tag = 'scoped memory for tpu_custom_call.1']
    #allocation4 [shape = 's32[1]{0}', space=sflag, size = 0x4, scoped, tag = 'scoped memory for tpu_custom_call.1']
    #allocation5 [shape = 'u8[8192]{0}', space=vmem, size = 0x2000, scoped, tag = 'output window, operand 0, single buffered']
    %6 = vsyncpa [#allocation3], 0
    %7 = vsyncpa [#allocation4], 0
    // Predicated region
    $region2: #{tpu_custom_call.1} parent=1 // pred_check
      _
    $region3: #{tpu_custom_call.1} parent=1 // pred_check_branch
      %9 = sbr.rel (0) target = $region5
    $region4: #{tpu_custom_call.1} parent=1 // pred_region
      %s11 = ssub.s32 256, 256
      %12 = vsyncadd [#allocation3], %s11
      %s14 = sshll.u32 [#allocation2], 4
      %s15 = int_to_ptr.vmem [resolvable:$true] %s14
      %17 = dma.hbm_to_vmem [thread:$0]  %s0, 256, %s15, [#allocation3]
    $region5: #{tpu_custom_call.1} parent=1 // pred_fallthru
      _
    // Predicated region
    $region6: #{tpu_custom_call.1} parent=1 // pred_check
      _
    $region7: #{tpu_custom_call.1} parent=1 // pred_check_branch
      %19 = sbr.rel (0) target = $region9
    $region8: #{tpu_custom_call.1} parent=1 // pred_region
      %20 = dma.done [#allocation3], 256
    $region9: #{tpu_custom_call.1} parent=1 // pred_fallthru
      _
    %v21 = vld [vmem:[#allocation2] sm:$0xff]
    %v22 = vld [vmem:[#allocation2 + $0x8] sm:$0xff]
    %v23 = vmul.f32 %v21, %v21
    %v24 = vmul.f32 %v22, %v22
    %25 = vst [vmem:[#allocation5] sm:$0xff] %v23
    %26 = vst [vmem:[#allocation5 + $0x8] sm:$0xff] %v24
    // Predicated region
    $region10: #{tpu_custom_call.1} parent=1 // pred_check
      _
    $region11: #{tpu_custom_call.1} parent=1 // pred_check_branch
      %28 = sbr.rel (0) target = $region13
    $region12: #{tpu_custom_call.1} parent=1 // pred_region
      %s30 = ssub.s32 256, 256
      %31 = vsyncadd [#allocation4], %s30
      %s33 = sshll.u32 [#allocation5], 4
      %s34 = int_to_ptr.vmem [resolvable:$true] %s33
      %36 = dma.vmem_to_hbm [thread:$0]  %s34, 256, %s1, [#allocation4]
    $region13: #{tpu_custom_call.1} parent=1 // pred_fallthru
      _
    // Predicated region
    $region14: #{tpu_custom_call.1} parent=1 // pred_check
      _
    $region15: #{tpu_custom_call.1} parent=1 // pred_check_branch
      %38 = sbr.rel (0) target = $region17
    $region16: #{tpu_custom_call.1} parent=1 // pred_region
      %39 = dma.done [#allocation4], 256
    $region17: #{tpu_custom_call.1} parent=1 // pred_fallthru
      _
    %40 = vsyncpa [#allocation3], 1
    %41 = vsyncpa [#allocation4], 1

</llo_original>
